<compile_context>
chip_gen: v7x
topology: tpu7x:2x2x1
jax: 0.10.0
libtpu: 0.0.40
codegen_flags: <defaults>
</compile_context>

<pallas_src>
import jax
import jax.numpy as jnp
from jax.experimental import pallas as pl
from jax.experimental.pallas import tpu as pltpu


def _conv_glu_kernel(x_ref, wa_ref, wg_ref, ba_ref, bg_ref, o_ref):
    """One (batch, T-tile) block: conv-as-matmul + bias + GLU.

    x_ref : (1, tT, K*C_in)    bf16 im2col patches
    wa_ref: (K*C_in, C_half)   bf16 weights, GLU "value" half
    wg_ref: (K*C_in, C_half)   bf16 weights, GLU "gate" half
    ba_ref: (1, C_half)        f32 bias, value half
    bg_ref: (1, C_half)        f32 bias, gate half
    o_ref : (1, tT, C_half)
    """
    x = x_ref[0]                                              # (tT, K*C_in) bf16
    a = jnp.dot(x, wa_ref[...], preferred_element_type=jnp.float32)
    g = jnp.dot(x, wg_ref[...], preferred_element_type=jnp.float32)
    a = a + ba_ref[0][None, :]
    g = g + bg_ref[0][None, :]
    o_ref[0] = (a * jax.nn.sigmoid(g)).astype(o_ref.dtype)


def _round_up(v, m):
    return ((v + m - 1) // m) * m


def conv1d_stride2_glu(x, weight, bias, *, out_dtype=None):
    """One fairseq Conv1d(stride=2, padding=k//2) + GLU layer.

    x:      (B, T, C_in)            activations (cast to bf16 for the MXU)
    weight: (C_out, C_in, K)        torch Conv1d layout
    bias:   (C_out,)
    returns (B, T_out, C_out // 2)  in `out_dtype` (default: x.dtype)
    """
    B, T, C_in = x.shape
    C_out, _, K = weight.shape
    assert C_out % 2 == 0
    C_half = C_out // 2
    out_dtype = x.dtype if out_dtype is None else out_dtype

    pad = K // 2
    T_out = (T + 2 * pad - K) // 2 + 1

    # --- im2col (plain XLA glue, single pass over the input) ----------------
    # patches[b, t, j*C_in + c] = x_pad[b, 2*t + j, c]
    x_bf = x.astype(jnp.bfloat16)
    x_pad = jnp.pad(x_bf, ((0, 0), (pad, pad), (0, 0)))
    cols = [
        jax.lax.slice_in_dim(x_pad, j, j + 2 * T_out - 1, stride=2, axis=1)
        for j in range(K)
    ]
    patches = jnp.concatenate(cols, axis=-1)                  # (B, T_out, K*C_in)

    # Pad T_out up to a tile multiple (extra rows are discarded afterwards).
    T_out_pad = _round_up(T_out, 8)
    tT = T_out_pad if T_out_pad <= 256 else 256
    T_out_pad = _round_up(T_out_pad, tT)
    if T_out_pad != T_out:
        patches = jnp.pad(patches, ((0, 0), (0, T_out_pad - T_out), (0, 0)))
    KC = K * C_in

    # --- weights: (C_out, C_in, K) -> (K*C_in, C_out), split into GLU halves
    w_flat = jnp.transpose(weight, (2, 1, 0)).reshape(KC, C_out)
    wa = w_flat[:, :C_half].astype(jnp.bfloat16)
    wg = w_flat[:, C_half:].astype(jnp.bfloat16)
    ba = bias[:C_half].reshape(1, C_half).astype(jnp.float32)
    bg = bias[C_half:].reshape(1, C_half).astype(jnp.float32)

    out = pl.pallas_call(
        _conv_glu_kernel,
        out_shape=jax.ShapeDtypeStruct((B, T_out_pad, C_half), out_dtype),
        grid=(B, T_out_pad // tT),
        in_specs=[
            pl.BlockSpec((1, tT, KC), lambda b, t: (b, t, 0)),
            pl.BlockSpec((KC, C_half), lambda b, t: (0, 0)),
            pl.BlockSpec((KC, C_half), lambda b, t: (0, 0)),
            pl.BlockSpec((1, C_half), lambda b, t: (0, 0)),
            pl.BlockSpec((1, C_half), lambda b, t: (0, 0)),
        ],
        out_specs=pl.BlockSpec((1, tT, C_half), lambda b, t: (b, t, 0)),
        compiler_params=pltpu.CompilerParams(
            dimension_semantics=("parallel", "parallel")),
    )(patches, wa, wg, ba, bg)

    return out[:, :T_out, :]


class Conv1dSubsampler:
    """JAX/Pallas port of fairseq's Conv1dSubsampler forward pass."""

    def __init__(self, in_channels, mid_channels, out_channels,
                 kernel_sizes=(3, 3), key=None):
        self.n_layers = len(kernel_sizes)
        self.kernel_sizes = tuple(kernel_sizes)
        key = jax.random.PRNGKey(0) if key is None else key
        self.weights = []
        self.biases = []
        for i, k in enumerate(kernel_sizes):
            c_in = in_channels if i == 0 else mid_channels // 2
            c_out = mid_channels if i < self.n_layers - 1 else out_channels * 2
            key, wk, bk = jax.random.split(key, 3)
            bound = 1.0 / float(c_in * k) ** 0.5  # torch Conv1d default init bound
            w = jax.random.uniform(wk, (c_out, c_in, k), jnp.float32, -bound, bound)
            b = jax.random.uniform(bk, (c_out,), jnp.float32, -bound, bound)
            self.weights.append(w)
            self.biases.append(b)

    def get_out_seq_lens(self, in_seq_lens):
        out = in_seq_lens.astype(jnp.float32)
        for _ in range(self.n_layers):
            out = jnp.floor((out - 1.0) / 2.0 + 1.0)
        return out.astype(jnp.int32)

    def __call__(self, src_tokens, src_lengths):
        # src_tokens: (B, T, C_in)  (same layout as the PyTorch input; we stay NWC)
        x = src_tokens
        for i, (w, b) in enumerate(zip(self.weights, self.biases)):
            od = jnp.bfloat16 if i < self.n_layers - 1 else jnp.float32
            x = conv1d_stride2_glu(x, w, b, out_dtype=od)
        x = jnp.transpose(x, (1, 0, 2))  # (T_out, B, C_out)
        return x, self.get_out_seq_lens(src_lengths)


def _ref_forward(model, src_tokens, src_lengths):
    """Pure-JAX reference (lax.conv) with the same bf16-operand / f32-accum
    numerics as the kernel, for correctness checking."""
    x = src_tokens
    for i, (w, b, k) in enumerate(
            zip(model.weights, model.biases, model.kernel_sizes)):
        xb = x.astype(jnp.bfloat16).astype(jnp.float32)
        wb = w.astype(jnp.bfloat16).astype(jnp.float32)
        y = jax.lax.conv_general_dilated(
            xb, jnp.transpose(wb, (2, 1, 0)),
            window_strides=(2,), padding=[(k // 2, k // 2)],
            dimension_numbers=("NWC", "WIO", "NWC"),
            precision=jax.lax.Precision.HIGHEST)
        y = y + b
        half = y.shape[-1] // 2
        x = y[..., :half] * jax.nn.sigmoid(y[..., half:])
        if i < model.n_layers - 1:
            x = x.astype(jnp.bfloat16)
    x = jnp.transpose(x.astype(jnp.float32), (1, 0, 2))
    return x, model.get_out_seq_lens(src_lengths)


if __name__ == "__main__":
    B, T, C_in = 2, 16, 16
    mid_channels, out_channels = 32, 16

    key = jax.random.PRNGKey(0)
    k_x, k_p = jax.random.split(key)
    src_tokens = jax.random.normal(k_x, (B, T, C_in), jnp.float32)
    src_lengths = jnp.array([16, 12], jnp.int32)

    model = Conv1dSubsampler(C_in, mid_channels, out_channels,
                             kernel_sizes=(3, 3), key=k_p)

    out, out_lens = model(src_tokens, src_lengths)
    out = jax.block_until_ready(out)
    out_lens = jax.block_until_ready(out_lens)

    ref_out, ref_lens = _ref_forward(model, src_tokens, src_lengths)
    assert out.shape == (4, B, out_channels), out.shape
    assert jnp.allclose(out, ref_out, atol=1e-3, rtol=1e-3), \
        float(jnp.max(jnp.abs(out - ref_out)))
    assert jnp.array_equal(out_lens, ref_lens)

    print("KERNEL_OK")
</pallas_src>

<mosaic_0001>
module attributes {stable_mosaic.version = 11 : i64} {
  func.func @_conv_glu_kernel(%arg0: i32, %arg1: i32, %arg2: memref<1x8x48xbf16, #tpu.memory_space<vmem>>, %arg3: memref<48x16xbf16, #tpu.memory_space<vmem>>, %arg4: memref<48x16xbf16, #tpu.memory_space<vmem>>, %arg5: memref<1x16xf32, #tpu.memory_space<vmem>>, %arg6: memref<1x16xf32, #tpu.memory_space<vmem>>, %arg7: memref<1x8x16xbf16, #tpu.memory_space<vmem>>) attributes {dimension_semantics = [#tpu.dimension_semantics<parallel>, #tpu.dimension_semantics<parallel>], iteration_bounds = array<i64: 2, 1>, scalar_prefetch = 0 : i64, scratch_operands = 0 : i64, tpu.core_type = #tpu.core_type<tc>, window_params = [{transform_indices = @transform_0, window_bounds = array<i64: 1, 8, 48>}, {pipeline_mode = #tpu.pipeline_mode<synchronous>, transform_indices = @transform_1, window_bounds = array<i64: 48, 16>}, {pipeline_mode = #tpu.pipeline_mode<synchronous>, transform_indices = @transform_2, window_bounds = array<i64: 48, 16>}, {pipeline_mode = #tpu.pipeline_mode<synchronous>, transform_indices = @transform_3, window_bounds = array<i64: 1, 16>}, {pipeline_mode = #tpu.pipeline_mode<synchronous>, transform_indices = @transform_4, window_bounds = array<i64: 1, 16>}, {transform_indices = @transform_5, window_bounds = array<i64: 1, 8, 16>}]} {
    %c0 = arith.constant 0 : index
    %c0_0 = arith.constant 0 : index
    %c0_1 = arith.constant 0 : index
    %0 = vector.load %arg2[%c0, %c0_0, %c0_1] : memref<1x8x48xbf16, #tpu.memory_space<vmem>>, vector<1x8x48xbf16>
    %1 = vector.shape_cast %0 : vector<1x8x48xbf16> to vector<8x48xbf16>
    %c0_2 = arith.constant 0 : index
    %c0_3 = arith.constant 0 : index
    %2 = vector.load %arg3[%c0_2, %c0_3] : memref<48x16xbf16, #tpu.memory_space<vmem>>, vector<48x16xbf16>
    %cst = arith.constant dense<0.000000e+00> : vector<8x16xf32>
    %3 = tpu.matmul %1, %2, %cst {dimension_numbers = #tpu.dot_dimension_numbers<[1], [0], [0], [1], [0, 0, 1, 1], [], []>} : vector<8x48xbf16>, vector<48x16xbf16>, vector<8x16xf32> -> vector<8x16xf32>
    %c0_4 = arith.constant 0 : index
    %c0_5 = arith.constant 0 : index
    %4 = vector.load %arg4[%c0_4, %c0_5] : memref<48x16xbf16, #tpu.memory_space<vmem>>, vector<48x16xbf16>
    %cst_6 = arith.constant dense<0.000000e+00> : vector<8x16xf32>
    %5 = tpu.matmul %1, %4, %cst_6 {dimension_numbers = #tpu.dot_dimension_numbers<[1], [0], [0], [1], [0, 0, 1, 1], [], []>} : vector<8x48xbf16>, vector<48x16xbf16>, vector<8x16xf32> -> vector<8x16xf32>
    %c0_7 = arith.constant 0 : index
    %c0_8 = arith.constant 0 : index
    %6 = vector.load %arg5[%c0_7, %c0_8] : memref<1x16xf32, #tpu.memory_space<vmem>>, vector<1x16xf32>
    %7 = vector.shape_cast %6 : vector<1x16xf32> to vector<16xf32>
    %8 = vector.shape_cast %7 : vector<16xf32> to vector<1x16xf32>
    %9 = vector.broadcast %8 : vector<1x16xf32> to vector<8x16xf32>
    %10 = arith.addf %3, %9 : vector<8x16xf32>
    %c0_9 = arith.constant 0 : index
    %c0_10 = arith.constant 0 : index
    %11 = vector.load %arg6[%c0_9, %c0_10] : memref<1x16xf32, #tpu.memory_space<vmem>>, vector<1x16xf32>
    %12 = vector.shape_cast %11 : vector<1x16xf32> to vector<16xf32>
    %13 = vector.shape_cast %12 : vector<16xf32> to vector<1x16xf32>
    %14 = vector.broadcast %13 : vector<1x16xf32> to vector<8x16xf32>
    %15 = arith.addf %5, %14 : vector<8x16xf32>
    %16 = arith.negf %15 : vector<8x16xf32>
    %17 = math.exp %16 : vector<8x16xf32>
    %cst_11 = arith.constant 1.000000e+00 : f32
    %18 = vector.broadcast %cst_11 : f32 to vector<8x16xf32>
    %19 = arith.addf %18, %17 : vector<8x16xf32>
    %20 = arith.divf %18, %19 : vector<8x16xf32>
    %21 = arith.mulf %10, %20 : vector<8x16xf32>
    %22 = arith.truncf %21 : vector<8x16xf32> to vector<8x16xbf16>
    %c0_12 = arith.constant 0 : index
    %c0_13 = arith.constant 0 : index
    %c0_14 = arith.constant 0 : index
    %23 = vector.load %arg7[%c0_12, %c0_13, %c0_14] : memref<1x8x16xbf16, #tpu.memory_space<vmem>>, vector<1x8x16xbf16>
    %24 = vector.shape_cast %23 : vector<1x8x16xbf16> to vector<8x16xbf16>
    %25 = vector.shape_cast %22 : vector<8x16xbf16> to vector<1x8x16xbf16>
    tpu.vector_store %arg7[%c0_12, %c0_13, %c0_14], %25 {strides = array<i32>} : memref<1x8x16xbf16, #tpu.memory_space<vmem>>, vector<1x8x16xbf16>,
    return
  }
  func.func @transform_0(%arg0: i32, %arg1: i32) -> (i32, i32, i32) {
    %c0_i32 = arith.constant 0 : i32
    %c0_i32_0 = arith.constant 0 : i32
    return %arg0, %arg1, %c0_i32 : i32, i32, i32
  }
  func.func @transform_1(%arg0: i32, %arg1: i32) -> (i32, i32) {
    %c0_i32 = arith.constant 0 : i32
    %c0_i32_0 = arith.constant 0 : i32
    %c0_i32_1 = arith.constant 0 : i32
    return %c0_i32, %c0_i32_0 : i32, i32
  }
  func.func @transform_2(%arg0: i32, %arg1: i32) -> (i32, i32) {
    %c0_i32 = arith.constant 0 : i32
    %c0_i32_0 = arith.constant 0 : i32
    %c0_i32_1 = arith.constant 0 : i32
    return %c0_i32, %c0_i32_0 : i32, i32
  }
  func.func @transform_3(%arg0: i32, %arg1: i32) -> (i32, i32) {
    %c0_i32 = arith.constant 0 : i32
    %c0_i32_0 = arith.constant 0 : i32
    %c0_i32_1 = arith.constant 0 : i32
    return %c0_i32, %c0_i32_0 : i32, i32
  }
  func.func @transform_4(%arg0: i32, %arg1: i32) -> (i32, i32) {
    %c0_i32 = arith.constant 0 : i32
    %c0_i32_0 = arith.constant 0 : i32
    %c0_i32_1 = arith.constant 0 : i32
    return %c0_i32, %c0_i32_0 : i32, i32
  }
  func.func @transform_5(%arg0: i32, %arg1: i32) -> (i32, i32, i32) {
    %c0_i32 = arith.constant 0 : i32
    %c0_i32_0 = arith.constant 0 : i32
    return %arg0, %arg1, %c0_i32 : i32, i32, i32
  }
}

</mosaic_0001>

<llo_original>
// kernel: tpu_custom_call.1
$region0: #{tpu_custom_call.1}
  #allocation0 [shape = 'u32[]', space=smem, size = 0x4, offset = 0x4, fixed_abs, tag = 'smem constant byte address 0x4 - core index']
  #allocation1 [shape = 'u32[144,128]{1,0:T(1,128)}', space=vmem, size = 0x12000, scoped, tag = 'internal scratch']
  %s0 = inlined_call_operand.vmem [shape: bf16[2,8,48], index: 0, kind: input, shape index: {}]
  %s1 = inlined_call_operand.vmem [shape: bf16[48,16], index: 1, kind: input, shape index: {}]
  %s2 = inlined_call_operand.vmem [shape: bf16[48,16], index: 2, kind: input, shape index: {}]
  %s3 = inlined_call_operand.vmem [shape: f32[1,16], index: 3, kind: input, shape index: {}]
  %s4 = inlined_call_operand.vmem [shape: f32[1,16], index: 4, kind: input, shape index: {}]
  %s5 = inlined_call_operand.hbm [shape: bf16[2,8,16], index: 5, kind: output, shape index: {}]
  %s6 = sld [smem:[#allocation0]]
  $region53: #{tpu_custom_call.1} parent=0
    _
  %s8 = ssub.s32 1, %s6
  %s9 = scalar_select 0, %s8, %s6
  $region1: #{tpu_custom_call.1} parent=0
    #allocation2 [shape = 'u8[4096]{0}', space=vmem, size = 0x1000, scoped, tag = 'output window, operand 0']
    #allocation3 [shape = 's32[2]{0}', space=sflag, size = 0x8, scoped, tag = 'scoped memory for tpu_custom_call.1']
    %10 = vsyncpa [#allocation3], 0
    %s11 = scalar_lea.sflag [#allocation3], 1
    %12 = vsyncpa %s11, 0
    loop: start=0, step=1, limit=4
    $region2: #{tpu_custom_call.1} parent=1 // loop_pre_header
      _
    $region3: #{tpu_custom_call.1} parent=1 // loop_header
      %s14 = sphi 0, %s18
      %p15 = scmp.ge.s32.totalorder %s14, 4
      %s21 = sphi 0, %s33
      %s22 = sphi 0, %s29
      %s23 = sphi 0, %s21
      %s24 = sphi 0, %s22
      %s25 = sphi 0, %s23
      %s26 = sphi 0, %s24
      %s38 = sphi 0, %s40
      %s41 = sphi 0, %s38
      %s42 = sphi 0, %s41
      %s58 = sphi 0, %s42
      %s62 = sphi 0, %s62
      %s64 = sphi 0, %s62
      %s65 = sphi 0, %s64
      %s79 = sphi 0, %s65
      %s83 = sphi 0, %s83
      %s85 = sphi 0, %s83
      %s86 = sphi 0, %s85
      %s100 = sphi 0, %s86
      %s104 = sphi 0, %s104
      %s106 = sphi 0, %s104
      %s107 = sphi 0, %s106
      %s121 = sphi 0, %s107
      %s125 = sphi 0, %s125
      %s127 = sphi 0, %s125
      %s128 = sphi 0, %s127
      %s142 = sphi 0, %s128
      %s150 = sphi 0, %s152
      %s153 = sphi 0, %s150
      %s154 = sphi 0, %s153
      %s170 = sphi 0, %s154
    $region4: #{tpu_custom_call.1} parent=1 // loop_header_branch
      %17 = sbr.rel (%p15) target = $region8
    $region5: #{tpu_custom_call.1} parent=1 // loop_body
      %s19 = ssub.s32 %s14, 1
      %s20 = ssub.s32 %s14, 2
      %s27 = sadd.s32 1, %s22
      %p28 = scmp.ge.s32.totalorder %s27, 1
      %s29 = scalar_select %p28, 0, %s27
      %s30 = sadd.s32 1, %s21
      %s31 = scalar_select %p28, %s30, %s21
      %p32 = scmp.ge.s32.totalorder %s31, 2
      %s33 = scalar_select %p32, 0, %s31
      %s34 = ssub.s32 %s21, %s33
      %s35 = ssub.s32 %s22, %s29
      %s36 = sor.u32 %s34, %s35
      %p37 = scmp.eq.s32.totalorder %s36, 0
      %s39 = sadd.s32 %s38, 1
      %s40 = scalar_select %p37, %s38, %s39
      %p43 = pneg %p37
      %p44 = scmp.eq.s32.totalorder %s14, 1
      %p45 = por %p43, %p44
      %p46 = scmp.ne.s32.totalorder %s38, %s41
      %p47 = scmp.eq.s32.totalorder %s14, 0
      %p48 = por %p46, %p47
      %p49 = scmp.ne.s32.totalorder %s38, %s41
      %p50 = scmp.eq.s32.totalorder %s19, 1
      %p51 = por %p49, %p50
      %p52 = scmp.ne.s32.totalorder %s41, %s42
      %p53 = scmp.eq.s32.totalorder %s19, 0
      %p54 = por %p52, %p53
      %p55 = scmp.ne.s32.totalorder %s41, %s42
      %p56 = scmp.eq.s32.totalorder %s20, 1
      %p57 = por %p55, %p56
      %p59 = scmp.ne.s32.totalorder %s42, %s58
      %p60 = scmp.eq.s32.totalorder %s20, 0
      %p61 = por %p59, %p60
      %s63 = sadd.s32 %s62, 1
      %p66 = scmp.eq.s32.totalorder %s14, 1
      %p67 = scmp.ne.s32.totalorder %s62, %s64
      %p68 = scmp.eq.s32.totalorder %s14, 0
      %p69 = por %p67, %p68
      %p70 = scmp.ne.s32.totalorder %s62, %s64
      %p71 = scmp.eq.s32.totalorder %s19, 1
      %p72 = por %p70, %p71
      %p73 = scmp.ne.s32.totalorder %s64, %s65
      %p74 = scmp.eq.s32.totalorder %s19, 0
      %p75 = por %p73, %p74
      %p76 = scmp.ne.s32.totalorder %s64, %s65
      %p77 = scmp.eq.s32.totalorder %s20, 1
      %p78 = por %p76, %p77
      %p80 = scmp.ne.s32.totalorder %s65, %s79
      %p81 = scmp.eq.s32.totalorder %s20, 0
      %p82 = por %p80, %p81
      %s84 = sadd.s32 %s83, 1
      %p87 = scmp.eq.s32.totalorder %s14, 1
      %p88 = scmp.ne.s32.totalorder %s83, %s85
      %p89 = scmp.eq.s32.totalorder %s14, 0
      %p90 = por %p88, %p89
      %p91 = scmp.ne.s32.totalorder %s83, %s85
      %p92 = scmp.eq.s32.totalorder %s19, 1
      %p93 = por %p91, %p92
      %p94 = scmp.ne.s32.totalorder %s85, %s86
      %p95 = scmp.eq.s32.totalorder %s19, 0
      %p96 = por %p94, %p95
      %p97 = scmp.ne.s32.totalorder %s85, %s86
      %p98 = scmp.eq.s32.totalorder %s20, 1
      %p99 = por %p97, %p98
      %p101 = scmp.ne.s32.totalorder %s86, %s100
      %p102 = scmp.eq.s32.totalorder %s20, 0
      %p103 = por %p101, %p102
      %s105 = sadd.s32 %s104, 1
      %p108 = scmp.eq.s32.totalorder %s14, 1
      %p109 = scmp.ne.s32.totalorder %s104, %s106
      %p110 = scmp.eq.s32.totalorder %s14, 0
      %p111 = por %p109, %p110
      %p112 = scmp.ne.s32.totalorder %s104, %s106
      %p113 = scmp.eq.s32.totalorder %s19, 1
      %p114 = por %p112, %p113
      %p115 = scmp.ne.s32.totalorder %s106, %s107
      %p116 = scmp.eq.s32.totalorder %s19, 0
      %p117 = por %p115, %p116
      %p118 = scmp.ne.s32.totalorder %s106, %s107
      %p119 = scmp.eq.s32.totalorder %s20, 1
      %p120 = por %p118, %p119
      %p122 = scmp.ne.s32.totalorder %s107, %s121
      %p123 = scmp.eq.s32.totalorder %s20, 0
      %p124 = por %p122, %p123
      %s126 = sadd.s32 %s125, 1
      %p129 = scmp.eq.s32.totalorder %s14, 1
      %p130 = scmp.ne.s32.totalorder %s125, %s127
      %p131 = scmp.eq.s32.totalorder %s14, 0
      %p132 = por %p130, %p131
      %p133 = scmp.ne.s32.totalorder %s125, %s127
      %p134 = scmp.eq.s32.totalorder %s19, 1
      %p135 = por %p133, %p134
      %p136 = scmp.ne.s32.totalorder %s127, %s128
      %p137 = scmp.eq.s32.totalorder %s19, 0
      %p138 = por %p136, %p137
      %p139 = scmp.ne.s32.totalorder %s127, %s128
      %p140 = scmp.eq.s32.totalorder %s20, 1
      %p141 = por %p139, %p140
      %p143 = scmp.ne.s32.totalorder %s128, %s142
      %p144 = scmp.eq.s32.totalorder %s20, 0
      %p145 = por %p143, %p144
      %s146 = ssub.s32 %s21, %s33
      %s147 = ssub.s32 %s22, %s29
      %s148 = sor.u32 %s146, %s147
      %p149 = scmp.eq.s32.totalorder %s148, 0
      %s151 = sadd.s32 %s150, 1
      %s152 = scalar_select %p149, %s150, %s151
      %p155 = pneg %p149
      %p156 = scmp.eq.s32.totalorder %s14, 1
      %p157 = por %p155, %p156
      %p158 = scmp.ne.s32.totalorder %s150, %s153
      %p159 = scmp.eq.s32.totalorder %s14, 0
      %p160 = por %p158, %p159
      %p161 = scmp.ne.s32.totalorder %s150, %s153
      %p162 = scmp.eq.s32.totalorder %s19, 1
      %p163 = por %p161, %p162
      %p164 = scmp.ne.s32.totalorder %s153, %s154
      %p165 = scmp.eq.s32.totalorder %s19, 0
      %p166 = por %p164, %p165
      %p167 = scmp.ne.s32.totalorder %s153, %s154
      %p168 = scmp.eq.s32.totalorder %s20, 1
      %p169 = por %p167, %p168
      %p171 = scmp.ne.s32.totalorder %s154, %s170
      %p172 = scmp.eq.s32.totalorder %s20, 0
      %p173 = por %p171, %p172
      %p174 = scmp.le.s32.totalorder 1, %s14
      %p175 = scmp.lt.s32.totalorder %s14, 3
      %p176 = pnand %p174, %p175
      %p177 = pneg %p176
      // Predicated region
      $region9: #{tpu_custom_call.1} parent=5 // pred_check
        _
      $region10: #{tpu_custom_call.1} parent=5 // pred_check_branch
        %179 = sbr.rel (%p176) target = $region12
      $region11: #{tpu_custom_call.1} parent=5 // pred_region
        %s180 = ssub.s32 %s14, 1
        // Predicated region
        $region13: #{tpu_custom_call.1} parent=11 // pred_check
          %p181 = pneg %p75
        $region14: #{tpu_custom_call.1} parent=11 // pred_check_branch
          %183 = sbr.rel (%p181) target = $region16
        $region15: #{tpu_custom_call.1} parent=11 // pred_region
          _
        $region16: #{tpu_custom_call.1} parent=11 // pred_fallthru
          _
        // Predicated region
        $region17: #{tpu_custom_call.1} parent=11 // pred_check
          %p184 = pneg %p96
        $region18: #{tpu_custom_call.1} parent=11 // pred_check_branch
          %186 = sbr.rel (%p184) target = $region20
        $region19: #{tpu_custom_call.1} parent=11 // pred_region
          _
        $region20: #{tpu_custom_call.1} parent=11 // pred_fallthru
          _
        // Predicated region
        $region21: #{tpu_custom_call.1} parent=11 // pred_check
          %p187 = pneg %p117
        $region22: #{tpu_custom_call.1} parent=11 // pred_check_branch
          %189 = sbr.rel (%p187) target = $region24
        $region23: #{tpu_custom_call.1} parent=11 // pred_region
          _
        $region24: #{tpu_custom_call.1} parent=11 // pred_fallthru
          _
        // Predicated region
        $region25: #{tpu_custom_call.1} parent=11 // pred_check
          %p190 = pneg %p138
        $region26: #{tpu_custom_call.1} parent=11 // pred_check_branch
          %192 = sbr.rel (%p190) target = $region28
        $region27: #{tpu_custom_call.1} parent=11 // pred_region
          _
        $region28: #{tpu_custom_call.1} parent=11 // pred_fallthru
          _
      $region12: #{tpu_custom_call.1} parent=5 // pred_fallthru
        _
      %p193 = scmp.lt.s32.totalorder %s14, 2
      // Predicated region
      $region29: #{tpu_custom_call.1} parent=5 // pred_check
        %p194 = pneg %p193
      $region30: #{tpu_custom_call.1} parent=5 // pred_check_branch
        %196 = sbr.rel (%p194) target = $region32
      $region31: #{tpu_custom_call.1} parent=5 // pred_region
        // Predicated region
        $region33: #{tpu_custom_call.1} parent=31 // pred_check
          %p197 = pneg %p48
        $region34: #{tpu_custom_call.1} parent=31 // pred_check_branch
          %199 = sbr.rel (%p197) target = $region36
        $region35: #{tpu_custom_call.1} parent=31 // pred_region
          %p200 = scmp.lt.s32.totalorder %s21, 1
          %s201 = scalar_select %p200, %s21, 1
          %p202 = scmp.lt.s32.totalorder %s22, 0
          %s203 = scalar_select %p202, %s22, 0
          %s204 = sadd.s32 %s203, %s201
          %s205 = smul.addr %s204, 4
          %s206 = scalar_lea.vmem %s0, %s205
        $region36: #{tpu_custom_call.1} parent=31 // pred_fallthru
          _
      $region32: #{tpu_custom_call.1} parent=5 // pred_fallthru
        _
      %p207 = scmp.le.s32.totalorder 1, %s14
      %p208 = scmp.lt.s32.totalorder %s14, 3
      %p209 = pnand %p207, %p208
      %p210 = pneg %p209
      // Predicated region
      $region37: #{tpu_custom_call.1} parent=5 // pred_check
        _
      $region38: #{tpu_custom_call.1} parent=5 // pred_check_branch
        %212 = sbr.rel (%p209) target = $region40
      $region39: #{tpu_custom_call.1} parent=5 // pred_region
        %s213 = ssub.s32 %s14, 1
        %p214 = scmp.lt.s32.totalorder %s23, 1
        %s215 = scalar_select %p214, %s23, 1
        %p216 = scmp.lt.s32.totalorder %s24, 0
        %s217 = scalar_select %p216, %s24, 0
        %s218 = sadd.s32 %s217, %s215
        %s219 = smul.addr %s218, 4
        %s220 = scalar_lea.vmem %s0, %s219
        %p221 = pneg %p54
        %p222 = pneg %p51
        %p223 = pneg %p75
        %p224 = pneg %p72
        %p225 = pneg %p96
        %p226 = pneg %p93
        %p227 = pneg %p117
        %p228 = pneg %p114
        %p229 = pneg %p138
        %p230 = pneg %p135
        %p231 = pneg %p166
        %p232 = pneg %p163
        %s233 = sand.u32 %s153, 1
        %s234 = scalar_lea.sflag [#allocation3], %s233
        %s235 = sand.u32 %s153, 1
        %s236 = smul.addr %s235, 4
        %s237 = scalar_lea.vmem [#allocation2], %s236
        %p238 = scmp.lt.s32.totalorder %s23, 1
        %s239 = scalar_select %p238, %s23, 1
        %p240 = scmp.lt.s32.totalorder %s24, 0
        %s241 = scalar_select %p240, %s24, 0
        %s242 = sadd.s32 %s241, %s239
        %s243 = smul.addr %s242, 4
        %s244 = scalar_lea.vmem %s0, %s243
        %v246 = vld [vmem:[%s244] sm:$0xf]
        %v247 = vld [vmem:[%s1] sm:$0xf]
        %v248 = vld [vmem:[%s1 + $0x4] sm:$0xf]
        %v249 = vld [vmem:[%s1 + $0x8] sm:$0xf]
        %v250 = vld [vmem:[%s1 + $0xc] sm:$0xf]
        %v251 = vld [vmem:[%s1 + $0x10] sm:$0xf]
        %v252 = vld [vmem:[%s1 + $0x14] sm:$0xf]
        %v253 = vld [vmem:[%s2] sm:$0xf]
        %v254 = vld [vmem:[%s2 + $0x4] sm:$0xf]
        %v255 = vld [vmem:[%s2 + $0x8] sm:$0xf]
        %v256 = vld [vmem:[%s2 + $0xc] sm:$0xf]
        %v257 = vld [vmem:[%s2 + $0x10] sm:$0xf]
        %v258 = vld [vmem:[%s2 + $0x14] sm:$0xf]
        %v259 = vld [vmem:[%s3] sm:$0x1]
        %v261 = vlaneseq
        %v262 = vshrl.u32 %v261, 7
        %v263 = vsub.s32 0, %v262
        %v264 = vrot.slane %v259, %v263
        %v272 = vunpack.c.l.b16 %v247
        %v273 = vunpack.c.l.b16 %v248
        %v274 = vunpack.c.l.b16 %v249
        %v275 = vunpack.c.l.b16 %v250
        %v276 = vunpack.c.l.b16 %v251
        %v277 = vunpack.c.l.b16 %v252
        %v278 = vpack.c.b16 %v273, %v272
        %v279 = vpack.c.b16 %v275, %v274
        %v280 = vpack.c.b16 %v277, %v276
        %vm284 = vcmask 392192
        %v286 = vsel %vm284, %v246, 0
        %288 = vmatprep.subr.bf16.mxu0 0
        %289 = vmatpush1.bf16.msra.mxu0 %v278
        %290 = vmatprep.subr.bf16.mxu0 0
        %291 = vmatpush1.bf16.msra.mxu0 %v279
        %292 = vmatprep.subr.bf16.mxu0 0
        %293 = vmatpush1.bf16.msra.mxu0 %v280
        %294 = vmatprep.subr.bf16.mxu0 0
        %295 = vmatpush1.bf16.msra.mxu0 0
        %296 = vmatprep.subr.bf16.mxu0 0
        %297 = vmatpush1.bf16.msra.mxu0 0
        %298 = vmatprep.subr.bf16.mxu0 0
        %299 = vmatpush1.bf16.msra.mxu0 0
        %300 = vmatprep.subr.bf16.mxu0 0
        %301 = vmatpush1.bf16.msra.mxu0 0
        %302 = vmatprep.subr.bf16.mxu0 0
        %303 = vmatpush1.bf16.msra.mxu0 0
        %304 = vmatprep.subr.bf16.mxu0 0
        %305 = vmatpush1.bf16.msra.mxu0 0
        %306 = vmatprep.subr.bf16.mxu0 0
        %307 = vmatpush1.bf16.msra.mxu0 0
        %308 = vmatprep.subr.bf16.mxu0 0
        %309 = vmatpush1.bf16.msra.mxu0 0
        %310 = vmatprep.subr.bf16.mxu0 0
        %311 = vmatpush1.bf16.msra.mxu0 0
        %312 = vmatprep.subr.bf16.mxu0 0
        %313 = vmatpush1.bf16.msra.mxu0 0
        %314 = vmatprep.subr.bf16.mxu0 0
        %315 = vmatpush1.bf16.msra.mxu0 0
        %316 = vmatprep.subr.bf16.mxu0 0
        %317 = vmatpush1.bf16.msra.mxu0 0
        %318 = vmatprep.subr.bf16.mxu0 0
        %319 = vmatpush1.bf16.msra.mxu0 0
        %320 = vmatprep.mubr.bf16.mxu0 0
        %321 = vmatmul.mubr.bf16.gmra.mrb[0].mxu0 %v286
        %v322 = vpop.f32.mrb[0].mxu0
        %v323 = vadd.f32 %v264, %v322
        %v324 = vpop.f32.mrb[0].mxu0
        %v325 = vpop.f32.mrb[0].mxu0
        %v326 = vpop.f32.mrb[0].mxu0
        %327 = vdwg.mxu0
        %v328 = vld [vmem:[%s4] sm:$0x1]
        %v330 = vlaneseq
        %v331 = vshrl.u32 %v330, 7
        %v332 = vsub.s32 0, %v331
        %v333 = vrot.slane %v328, %v332
        %v341 = vunpack.c.l.b16 %v253
        %v342 = vunpack.c.l.b16 %v254
        %v343 = vunpack.c.l.b16 %v255
        %v344 = vunpack.c.l.b16 %v256
        %v345 = vunpack.c.l.b16 %v257
        %v346 = vunpack.c.l.b16 %v258
        %v347 = vpack.c.b16 %v342, %v341
        %v348 = vpack.c.b16 %v344, %v343
        %v349 = vpack.c.b16 %v346, %v345
        %353 = vmatprep.subr.bf16.mxu0 0
        %354 = vmatpush1.bf16.msra.mxu0 %v347
        %355 = vmatprep.subr.bf16.mxu0 0
        %356 = vmatpush1.bf16.msra.mxu0 %v348
        %357 = vmatprep.subr.bf16.mxu0 0
        %358 = vmatpush1.bf16.msra.mxu0 %v349
        %359 = vmatprep.subr.bf16.mxu0 0
        %360 = vmatpush1.bf16.msra.mxu0 0
        %361 = vmatprep.subr.bf16.mxu0 0
        %362 = vmatpush1.bf16.msra.mxu0 0
        %363 = vmatprep.subr.bf16.mxu0 0
        %364 = vmatpush1.bf16.msra.mxu0 0
        %365 = vmatprep.subr.bf16.mxu0 0
        %366 = vmatpush1.bf16.msra.mxu0 0
        %367 = vmatprep.subr.bf16.mxu0 0
        %368 = vmatpush1.bf16.msra.mxu0 0
        %369 = vmatprep.subr.bf16.mxu0 0
        %370 = vmatpush1.bf16.msra.mxu0 0
        %371 = vmatprep.subr.bf16.mxu0 0
        %372 = vmatpush1.bf16.msra.mxu0 0
        %373 = vmatprep.subr.bf16.mxu0 0
        %374 = vmatpush1.bf16.msra.mxu0 0
        %375 = vmatprep.subr.bf16.mxu0 0
        %376 = vmatpush1.bf16.msra.mxu0 0
        %377 = vmatprep.subr.bf16.mxu0 0
        %378 = vmatpush1.bf16.msra.mxu0 0
        %379 = vmatprep.subr.bf16.mxu0 0
        %380 = vmatpush1.bf16.msra.mxu0 0
        %381 = vmatprep.subr.bf16.mxu0 0
        %382 = vmatpush1.bf16.msra.mxu0 0
        %383 = vmatprep.subr.bf16.mxu0 0
        %384 = vmatpush1.bf16.msra.mxu0 0
        %385 = vmatprep.mubr.bf16.mxu0 0
        %386 = vmatmul.mubr.bf16.gmra.mrb[0].mxu0 %v286
        %v387 = vpop.f32.mrb[0].mxu0
        %v388 = vadd.f32 %v333, %v387
        %v389 = vpop.f32.mrb[0].mxu0
        %v390 = vpop.f32.mrb[0].mxu0
        %v391 = vpop.f32.mrb[0].mxu0
        %392 = vdwg.mxu0
        %v393 = vxor.u32 %v388, 2147483648
        %v394 = vmul.f32 %v393, 1.442695
        %v395 = vpow.pop %v394
        %v396 = vadd.f32 %v395, 1.0
        %v397 = vrcp.pop %v396
        %v398 = vmul.f32 1.0, %v397
        %v399 = vmul.f32 %v323, %v398
        %v400 = vpack.c.bf16 %v399, %v399
        %vm401 = vcmask 125952
        %402 = vst.msk [vmem:[%s237] sm:$0xf] %vm401, %v400
        %s403 = sand.u32 %s153, 1
        %s404 = scalar_lea.sflag [#allocation3], %s403
        %s405 = sand.u32 %s153, 1
        %s406 = smul.addr %s405, 4
        %s407 = scalar_lea.vmem [#allocation2], %s406
        // Predicated region
        $region41: #{tpu_custom_call.1} parent=39 // pred_check
          %p408 = pneg %p163
        $region42: #{tpu_custom_call.1} parent=39 // pred_check_branch
          %410 = sbr.rel (%p408) target = $region44
        $region43: #{tpu_custom_call.1} parent=39 // pred_region
          %s412 = ssub.s32 64, 64
          %413 = vsyncadd %s404, %s412
          %s414 = sadd.s32 %s24, %s23
          %s415 = smul.addr %s414, 64
          %s416 = scalar_lea.hbm %s5, %s415
          %s418 = sshll.u32 %s407, 4
          %s419 = int_to_ptr.vmem [resolvable:$true] %s418
          %421 = dma.vmem_to_hbm [thread:$0]  %s419, 64, %s416, %s404
        $region44: #{tpu_custom_call.1} parent=39 // pred_fallthru
          _
      $region40: #{tpu_custom_call.1} parent=5 // pred_fallthru
        _
      %p422 = scmp.le.s32.totalorder 2, %s14
      // Predicated region
      $region45: #{tpu_custom_call.1} parent=5 // pred_check
        %p423 = pneg %p422
      $region46: #{tpu_custom_call.1} parent=5 // pred_check_branch
        %425 = sbr.rel (%p423) target = $region48
      $region47: #{tpu_custom_call.1} parent=5 // pred_region
        %s426 = ssub.s32 %s14, 2
        // Predicated region
        $region49: #{tpu_custom_call.1} parent=47 // pred_check
          %p427 = pneg %p169
        $region50: #{tpu_custom_call.1} parent=47 // pred_check_branch
          %429 = sbr.rel (%p427) target = $region52
        $region51: #{tpu_custom_call.1} parent=47 // pred_region
          %s430 = sand.u32 %s154, 1
          %s431 = scalar_lea.sflag [#allocation3], %s430
          %s432 = sand.u32 %s154, 1
          %s433 = smul.addr %s432, 4
          %s434 = scalar_lea.vmem [#allocation2], %s433
          %435 = dma.done %s431, 64
        $region52: #{tpu_custom_call.1} parent=47 // pred_fallthru
          _
      $region48: #{tpu_custom_call.1} parent=5 // pred_fallthru
        _
    $region6: #{tpu_custom_call.1} parent=1 // loop_footer
      %s18 = sadd.s32 1, %s14
    $region7: #{tpu_custom_call.1} parent=1 // loop_footer_branch
      %13 = sbr.rel target = $region3
    $region8: #{tpu_custom_call.1} parent=1 // loop_exit
      _
    %436 = vsyncpa [#allocation3], 1
    %s437 = scalar_lea.sflag [#allocation3], 1
    %438 = vsyncpa %s437, 1

</llo_original>
